<compile_context>
chip_gen: v5e
topology: v5e:2x2
jax: 0.10.0
libtpu: 0.0.40
codegen_flags: <defaults>
</compile_context>

<pallas_src>
import functools

import jax
import jax.numpy as jnp
from jax.experimental import pallas as pl
from jax.experimental.pallas import tpu as pltpu


def _loss_kernel(p_ref, pi_ref, v_ref, z_ref, o_ref, pol_acc, val_acc, *,
                 n_rows, n_val):
    i = pl.program_id(1)  # streamed ("arbitrary") batch-tile axis

    @pl.when(i == 0)
    def _init():
        pol_acc[...] = jnp.zeros_like(pol_acc)
        val_acc[...] = jnp.zeros_like(val_acc)

    # Policy term: lane-wide partial sums; defer the cross-lane reduce to the
    # finalize step so the steady state is just VPU mul + sublane add.
    prod = pi_ref[...].astype(jnp.float32) * p_ref[...].astype(jnp.float32)
    pol_acc[...] += jnp.sum(prod, axis=0, keepdims=True)

    # Value-head squared error streamed alongside (padded elems have v == z == 0).
    d = v_ref[0].astype(jnp.float32) - z_ref[0].astype(jnp.float32)
    val_acc[...] += d * d

    @pl.when(i == pl.num_programs(1) - 1)
    def _finalize():
        value_loss = jnp.sum(val_acc[...]) * (1.0 / n_val)
        policy_loss = -jnp.sum(pol_acc[...]) * (1.0 / n_rows)
        o_ref[...] = jnp.full(o_ref.shape, value_loss + policy_loss, jnp.float32)


def _vmem_capacity_bytes():
    try:
        return int(pltpu.get_tpu_info().vmem_capacity_bytes)
    except Exception:
        return 64 << 20  # conservative: v7x per-TC physical VMEM


def _sublane_pack(itemsize):
    # f32 -> 8, bf16 -> 16, int8/fp8 -> 32 (sub-32-bit dtypes pack sublanes).
    return max(8, 32 // max(1, itemsize))


def _choose_batch_tile(B, A, itemsize, input_budget_bytes):
    """Largest batch tile (multiple of the dtype sublane pack) such that the
    2 streamed inputs x 2 pipeline buffers fit the VMEM budget."""
    pack = _sublane_pack(itemsize)
    per_row = 2 * 2 * A * itemsize
    max_rows = max(pack, input_budget_bytes // per_row)
    max_rows = min(max_rows, 32768)              # keep per-step DMA sane
    b_ceil = -(-B // pack) * pack                # B rounded up to the pack
    tile = int(min(max_rows, b_ceil))
    return max(pack, (tile // pack) * pack)


def policy_value_loss(p_hat, pi, value, z, *, batch_tile=None, n_splits=None):
    """Pallas implementation of PolicyValueLoss.forward. Returns a scalar."""
    B, A = p_hat.shape
    assert pi.shape == (B, A)
    assert value.shape == z.shape
    n_val = int(value.size)

    itemsize = p_hat.dtype.itemsize
    pack = _sublane_pack(itemsize)
    vmem_cap = _vmem_capacity_bytes()
    input_budget = min(24 << 20, vmem_cap // 3)

    if batch_tile is None:
        batch_tile = _choose_batch_tile(B, A, itemsize, input_budget)
    batch_tile = max(pack, (int(batch_tile) + pack - 1) // pack * pack)

    num_tiles_raw = -(-B // batch_tile)          # cdiv

    # Dual-TensorCore split (v7x). Harmless on 1-TC chips; only enabled when
    # the extra padded tile (if any) is a small fraction of the work.
    # TODO(synk): query the physical TensorCore count instead of a heuristic.
    if n_splits is None:
        n_splits = 2 if (num_tiles_raw >= 2 and
                         (num_tiles_raw % 2 == 0 or num_tiles_raw >= 8)) else 1
    n_splits = max(1, int(n_splits))

    tiles_per_split = -(-num_tiles_raw // n_splits)
    total_tiles = n_splits * tiles_per_split
    B_pad = total_tiles * batch_tile

    if B_pad != B:
        p_hat_p = jnp.pad(p_hat, ((0, B_pad - B), (0, 0)))
        pi_p = jnp.pad(pi, ((0, B_pad - B), (0, 0)))
    else:
        p_hat_p, pi_p = p_hat, pi

    # value / z stream lane-dense alongside the policy tiles.
    vchunk = -(-n_val // total_tiles)
    v_flat = value.reshape(-1)
    z_flat = z.reshape(-1)
    pad_v = total_tiles * vchunk - n_val
    if pad_v:
        v_flat = jnp.pad(v_flat, (0, pad_v))
        z_flat = jnp.pad(z_flat, (0, pad_v))
    v3 = v_flat.reshape(total_tiles, 1, vchunk)
    z3 = z_flat.reshape(total_tiles, 1, vchunk)

    kernel = functools.partial(_loss_kernel, n_rows=B, n_val=n_val)

    val_itemsize = v3.dtype.itemsize
    vmem_needed = (4 * batch_tile * A * itemsize        # 2 inputs x 2 buffers
                   + 2 * 2 * vchunk * val_itemsize      # value/z x 2 buffers
                   + 4 * (A + vchunk)                   # f32 accumulators
                   + 2 * n_splits * 128 * 4)            # output blocks
    vmem_limit = int(min(vmem_needed + (8 << 20), vmem_cap))

    cost = pl.CostEstimate(
        flops=3 * B * A + 3 * n_val,
        transcendentals=0,
        bytes_accessed=2 * B * A * itemsize + 2 * n_val * val_itemsize + 4,
    )

    out = pl.pallas_call(
        kernel,
        out_shape=jax.ShapeDtypeStruct((n_splits, 1, 128), jnp.float32),
        grid=(n_splits, tiles_per_split),
        in_specs=[
            pl.BlockSpec((batch_tile, A),
                         lambda c, i: (c * tiles_per_split + i, 0)),
            pl.BlockSpec((batch_tile, A),
                         lambda c, i: (c * tiles_per_split + i, 0)),
            pl.BlockSpec((1, 1, vchunk),
                         lambda c, i: (c * tiles_per_split + i, 0, 0)),
            pl.BlockSpec((1, 1, vchunk),
                         lambda c, i: (c * tiles_per_split + i, 0, 0)),
        ],
        out_specs=pl.BlockSpec((1, 1, 128), lambda c, i: (c, 0, 0)),
        scratch_shapes=[pltpu.VMEM((1, A), jnp.float32),
                        pltpu.VMEM((1, vchunk), jnp.float32)],
        compiler_params=pltpu.CompilerParams(
            dimension_semantics=("parallel", "arbitrary"),
            vmem_limit_bytes=vmem_limit,
        ),
        cost_estimate=cost,
    )(p_hat_p, pi_p, v3, z3)

    # Combine per-split partial losses (linear, so the sum is exact).
    return jnp.sum(out[:, 0, 0])


def _reference(p_hat, pi, value, z):
    p_hat = p_hat.astype(jnp.float32)
    pi = pi.astype(jnp.float32)
    value = value.astype(jnp.float32)
    z = z.astype(jnp.float32)
    value_loss = jnp.mean((value - z) ** 2)
    policy_loss = -jnp.mean(jnp.sum(pi * p_hat, axis=1))
    return value_loss + policy_loss


if __name__ == "__main__":
    def make_inputs(key, B, A, dtype=jnp.float32):
        k1, k2, k3, k4 = jax.random.split(key, 4)
        p_hat = jax.nn.log_softmax(jax.random.normal(k1, (B, A), jnp.float32), axis=1)
        pi = jax.nn.softmax(jax.random.normal(k2, (B, A), jnp.float32), axis=1)
        value = jnp.tanh(jax.random.normal(k3, (B, 1), jnp.float32))
        z = jnp.tanh(jax.random.normal(k4, (B, 1), jnp.float32))
        return p_hat.astype(dtype), pi.astype(dtype), value, z

    # 1) Small single-tile path (B=8, A=128).
    p_hat, pi, value, z = make_inputs(jax.random.PRNGKey(0), 8, 128)
    loss = policy_value_loss(p_hat, pi, value, z)
    jax.block_until_ready(loss)
    ref = _reference(p_hat, pi, value, z)
    assert jnp.allclose(loss, ref, atol=1e-5, rtol=1e-5), (loss, ref)

    # 2) Non-divisible batch -> pad-and-cdiv + 2-way parallel split (grid 2x2).
    p_hat, pi, value, z = make_inputs(jax.random.PRNGKey(1), 27, 128)
    loss = policy_value_loss(p_hat, pi, value, z, batch_tile=8)
    jax.block_until_ready(loss)
    ref = _reference(p_hat, pi, value, z)
    assert jnp.allclose(loss, ref, atol=1e-5, rtol=1e-5), (loss, ref)

    # 3) bf16 inputs -> 16-row sublane pack path.
    p_hat, pi, value, z = make_inputs(jax.random.PRNGKey(2), 32, 128, jnp.bfloat16)
    loss = policy_value_loss(p_hat, pi, value, z, batch_tile=16)
    jax.block_until_ready(loss)
    ref = _reference(p_hat, pi, value, z)
    assert jnp.allclose(loss, ref, atol=1e-4, rtol=1e-4), (loss, ref)

    print("KERNEL_OK")
</pallas_src>

<mosaic_0001>
module attributes {stable_mosaic.version = 11 : i64} {
  func.func @_loss_kernel(%arg0: i32, %arg1: i32, %arg2: memref<8x128xf32, #tpu.memory_space<vmem>>, %arg3: memref<8x128xf32, #tpu.memory_space<vmem>>, %arg4: memref<1x1x8xf32, #tpu.memory_space<vmem>>, %arg5: memref<1x1x8xf32, #tpu.memory_space<vmem>>, %arg6: memref<1x1x128xf32, #tpu.memory_space<vmem>>, %arg7: memref<1x128xf32, #tpu.memory_space<vmem>>, %arg8: memref<1x8xf32, #tpu.memory_space<vmem>>) attributes {dimension_semantics = [#tpu.dimension_semantics<parallel>, #tpu.dimension_semantics<arbitrary>], iteration_bounds = array<i64: 1, 1>, scalar_prefetch = 0 : i64, scratch_operands = 2 : i64, tpu.core_type = #tpu.core_type<tc>, window_params = [{transform_indices = @transform_0, window_bounds = array<i64: 8, 128>}, {transform_indices = @transform_1, window_bounds = array<i64: 8, 128>}, {transform_indices = @transform_2, window_bounds = array<i64: 1, 1, 8>}, {transform_indices = @transform_3, window_bounds = array<i64: 1, 1, 8>}, {transform_indices = @transform_4, window_bounds = array<i64: 1, 1, 128>}]} {
    %c0_i32 = arith.constant 0 : i32
    %0 = arith.cmpi eq, %arg1, %c0_i32 : i32
    %1 = arith.extui %0 : i1 to i32
    %c0_i32_0 = arith.constant 0 : i32
    %2 = arith.cmpi ne, %1, %c0_i32_0 : i32
    scf.if %2 {
      %cst_20 = arith.constant 0.000000e+00 : f32
      %23 = vector.broadcast %cst_20 : f32 to vector<1x128xf32>
      %c0_21 = arith.constant 0 : index
      %c0_22 = arith.constant 0 : index
      %24 = vector.load %arg7[%c0_21, %c0_22] : memref<1x128xf32, #tpu.memory_space<vmem>>, vector<1x128xf32>
      tpu.vector_store %arg7[%c0_21, %c0_22], %23 {strides = array<i32>} : memref<1x128xf32, #tpu.memory_space<vmem>>, vector<1x128xf32>,
      %cst_23 = arith.constant 0.000000e+00 : f32
      %25 = vector.broadcast %cst_23 : f32 to vector<1x8xf32>
      %c0_24 = arith.constant 0 : index
      %c0_25 = arith.constant 0 : index
      %26 = vector.load %arg8[%c0_24, %c0_25] : memref<1x8xf32, #tpu.memory_space<vmem>>, vector<1x8xf32>
      tpu.vector_store %arg8[%c0_24, %c0_25], %25 {strides = array<i32>} : memref<1x8xf32, #tpu.memory_space<vmem>>, vector<1x8xf32>,
    } else {
    }
    %c0 = arith.constant 0 : index
    %c0_1 = arith.constant 0 : index
    %3 = vector.load %arg3[%c0, %c0_1] : memref<8x128xf32, #tpu.memory_space<vmem>>, vector<8x128xf32>
    %c0_2 = arith.constant 0 : index
    %c0_3 = arith.constant 0 : index
    %4 = vector.load %arg2[%c0_2, %c0_3] : memref<8x128xf32, #tpu.memory_space<vmem>>, vector<8x128xf32>
    %5 = arith.mulf %3, %4 : vector<8x128xf32>
    %c0_4 = arith.constant 0 : index
    %c0_5 = arith.constant 0 : index
    %6 = vector.load %arg7[%c0_4, %c0_5] : memref<1x128xf32, #tpu.memory_space<vmem>>, vector<1x128xf32>
    %cst = arith.constant dense<0.000000e+00> : vector<128xf32>
    %7 = vector.multi_reduction <add>, %5, %cst [0] : vector<8x128xf32> to vector<128xf32>
    %8 = vector.shape_cast %7 : vector<128xf32> to vector<1x128xf32>
    %9 = arith.addf %6, %8 : vector<1x128xf32>
    %c0_6 = arith.constant 0 : index
    %c0_7 = arith.constant 0 : index
    %10 = vector.load %arg7[%c0_6, %c0_7] : memref<1x128xf32, #tpu.memory_space<vmem>>, vector<1x128xf32>
    tpu.vector_store %arg7[%c0_6, %c0_7], %9 {strides = array<i32>} : memref<1x128xf32, #tpu.memory_space<vmem>>, vector<1x128xf32>,
    %c0_8 = arith.constant 0 : index
    %c0_9 = arith.constant 0 : index
    %c0_10 = arith.constant 0 : index
    %11 = vector.load %arg4[%c0_8, %c0_9, %c0_10] : memref<1x1x8xf32, #tpu.memory_space<vmem>>, vector<1x1x8xf32>
    %12 = vector.shape_cast %11 : vector<1x1x8xf32> to vector<1x8xf32>
    %c0_11 = arith.constant 0 : index
    %c0_12 = arith.constant 0 : index
    %c0_13 = arith.constant 0 : index
    %13 = vector.load %arg5[%c0_11, %c0_12, %c0_13] : memref<1x1x8xf32, #tpu.memory_space<vmem>>, vector<1x1x8xf32>
    %14 = vector.shape_cast %13 : vector<1x1x8xf32> to vector<1x8xf32>
    %15 = arith.subf %12, %14 : vector<1x8xf32>
    %c0_14 = arith.constant 0 : index
    %c0_15 = arith.constant 0 : index
    %16 = vector.load %arg8[%c0_14, %c0_15] : memref<1x8xf32, #tpu.memory_space<vmem>>, vector<1x8xf32>
    %17 = arith.mulf %15, %15 : vector<1x8xf32>
    %18 = arith.addf %16, %17 : vector<1x8xf32>
    %c0_16 = arith.constant 0 : index
    %c0_17 = arith.constant 0 : index
    %19 = vector.load %arg8[%c0_16, %c0_17] : memref<1x8xf32, #tpu.memory_space<vmem>>, vector<1x8xf32>
    tpu.vector_store %arg8[%c0_16, %c0_17], %18 {strides = array<i32>} : memref<1x8xf32, #tpu.memory_space<vmem>>, vector<1x8xf32>,
    %c0_i32_18 = arith.constant 0 : i32
    %20 = arith.cmpi eq, %arg1, %c0_i32_18 : i32
    %21 = arith.extui %20 : i1 to i32
    %c0_i32_19 = arith.constant 0 : i32
    %22 = arith.cmpi ne, %21, %c0_i32_19 : i32
    scf.if %22 {
      %c0_20 = arith.constant 0 : index
      %c0_21 = arith.constant 0 : index
      %23 = vector.load %arg8[%c0_20, %c0_21] : memref<1x8xf32, #tpu.memory_space<vmem>>, vector<1x8xf32>
      %24 = vector.shape_cast %23 : vector<1x8xf32> to vector<1x1x8xf32>
      %cst_22 = arith.constant dense<0.000000e+00> : vector<1xf32>
      %25 = vector.multi_reduction <add>, %24, %cst_22 [1, 2] : vector<1x1x8xf32> to vector<1xf32>
      %26 = vector.shape_cast %25 : vector<1xf32> to vector<1x1x1xf32>
      %27 = vector.extract %26[0, 0, 0] : f32 from vector<1x1x1xf32>
      %cst_23 = arith.constant 1.250000e-01 : f32
      %28 = arith.mulf %27, %cst_23 : f32
      %c0_24 = arith.constant 0 : index
      %c0_25 = arith.constant 0 : index
      %29 = vector.load %arg7[%c0_24, %c0_25] : memref<1x128xf32, #tpu.memory_space<vmem>>, vector<1x128xf32>
      %30 = vector.shape_cast %29 : vector<1x128xf32> to vector<1x1x128xf32>
      %cst_26 = arith.constant dense<0.000000e+00> : vector<1xf32>
      %31 = vector.multi_reduction <add>, %30, %cst_26 [1, 2] : vector<1x1x128xf32> to vector<1xf32>
      %32 = vector.shape_cast %31 : vector<1xf32> to vector<1x1x1xf32>
      %33 = vector.extract %32[0, 0, 0] : f32 from vector<1x1x1xf32>
      %cst_27 = arith.constant 0.000000e+00 : f32
      %34 = arith.subf %cst_27, %33 : f32
      %cst_28 = arith.constant 1.250000e-01 : f32
      %35 = arith.mulf %34, %cst_28 : f32
      %36 = arith.addf %28, %35 : f32
      %37 = vector.broadcast %36 : f32 to vector<1x1x128xf32>
      %c0_29 = arith.constant 0 : index
      %c0_30 = arith.constant 0 : index
      %c0_31 = arith.constant 0 : index
      %38 = vector.load %arg6[%c0_29, %c0_30, %c0_31] : memref<1x1x128xf32, #tpu.memory_space<vmem>>, vector<1x1x128xf32>
      tpu.vector_store %arg6[%c0_29, %c0_30, %c0_31], %37 {strides = array<i32>} : memref<1x1x128xf32, #tpu.memory_space<vmem>>, vector<1x1x128xf32>,
    } else {
    }
    return
  }
  func.func @transform_0(%arg0: i32, %arg1: i32) -> (i32, i32) {
    %c1_i32 = arith.constant 1 : i32
    %0 = arith.muli %arg0, %c1_i32 : i32
    %1 = arith.addi %0, %arg1 : i32
    %c0_i32 = arith.constant 0 : i32
    %c0_i32_0 = arith.constant 0 : i32
    return %1, %c0_i32 : i32, i32
  }
  func.func @transform_1(%arg0: i32, %arg1: i32) -> (i32, i32) {
    %c1_i32 = arith.constant 1 : i32
    %0 = arith.muli %arg0, %c1_i32 : i32
    %1 = arith.addi %0, %arg1 : i32
    %c0_i32 = arith.constant 0 : i32
    %c0_i32_0 = arith.constant 0 : i32
    return %1, %c0_i32 : i32, i32
  }
  func.func @transform_2(%arg0: i32, %arg1: i32) -> (i32, i32, i32) {
    %c1_i32 = arith.constant 1 : i32
    %0 = arith.muli %arg0, %c1_i32 : i32
    %1 = arith.addi %0, %arg1 : i32
    %c0_i32 = arith.constant 0 : i32
    %c0_i32_0 = arith.constant 0 : i32
    %c0_i32_1 = arith.constant 0 : i32
    return %1, %c0_i32, %c0_i32_0 : i32, i32, i32
  }
  func.func @transform_3(%arg0: i32, %arg1: i32) -> (i32, i32, i32) {
    %c1_i32 = arith.constant 1 : i32
    %0 = arith.muli %arg0, %c1_i32 : i32
    %1 = arith.addi %0, %arg1 : i32
    %c0_i32 = arith.constant 0 : i32
    %c0_i32_0 = arith.constant 0 : i32
    %c0_i32_1 = arith.constant 0 : i32
    return %1, %c0_i32, %c0_i32_0 : i32, i32, i32
  }
  func.func @transform_4(%arg0: i32, %arg1: i32) -> (i32, i32, i32) {
    %c0_i32 = arith.constant 0 : i32
    %c0_i32_0 = arith.constant 0 : i32
    %c0_i32_1 = arith.constant 0 : i32
    return %arg0, %c0_i32, %c0_i32_0 : i32, i32, i32
  }
}

</mosaic_0001>

<llo_original>
// kernel: tpu_custom_call.1
$region0: #{tpu_custom_call.1}
  #allocation0 [shape = 'u32[]', space=smem, size = 0x4, offset = 0x4, fixed_abs, tag = 'smem constant byte address 0x4 - core index']
  #allocation1 [shape = 'u32[72,128]{1,0:T(1,128)}', space=vmem, size = 0x9000, scoped, tag = 'internal scratch']
  #allocation2 [shape = 'f32[1,128]{1,0:T(1,128)}', space=vmem, size = 0x200, scoped, tag = 'scratch operand']
  #allocation3 [shape = 'f32[1,8]{1,0:T(1,128)}', space=vmem, size = 0x200, scoped, tag = 'scratch operand']
  %s0 = inlined_call_operand.hbm [shape: f32[8,128], index: 0, kind: input, shape index: {}]
  %s1 = inlined_call_operand.hbm [shape: f32[8,128], index: 1, kind: input, shape index: {}]
  %s2 = inlined_call_operand.vmem [shape: f32[1,1,8], index: 2, kind: input, shape index: {}]
  %s3 = inlined_call_operand.vmem [shape: f32[1,1,8], index: 3, kind: input, shape index: {}]
  %s4 = inlined_call_operand.hbm [shape: f32[1,1,128], index: 4, kind: output, shape index: {}]
  %s5 = sld [smem:[#allocation0]]
  $region42: #{tpu_custom_call.1} parent=0
    _
  %s7 = ssub.s32 1, %s5
  %s8 = scalar_select 0, %s7, %s5
  $region1: #{tpu_custom_call.1} parent=0
    #allocation4 [shape = 'u8[4096]{0}', space=vmem, size = 0x1000, scoped, tag = 'input window, operand 0, single buffered']
    #allocation5 [shape = 's32[1]{0}', space=sflag, size = 0x4, scoped, tag = 'scoped memory for tpu_custom_call.1']
    #allocation6 [shape = 's32[1]{0}', space=sflag, size = 0x4, scoped, tag = 'scoped memory for tpu_custom_call.1']
    #allocation7 [shape = 'u8[4096]{0}', space=vmem, size = 0x1000, scoped, tag = 'input window, operand 1, single buffered']
    #allocation8 [shape = 's32[1]{0}', space=sflag, size = 0x4, scoped, tag = 'scoped memory for tpu_custom_call.1']
    #allocation9 [shape = 'u8[512]{0}', space=vmem, size = 0x400, scoped, tag = 'output window, operand 0, single buffered']
    %9 = vsyncpa [#allocation5], 0
    %10 = vsyncpa [#allocation8], 0
    %11 = vsyncpa [#allocation6], 0
    // Predicated region
    $region2: #{tpu_custom_call.1} parent=1 // pred_check
      _
    $region3: #{tpu_custom_call.1} parent=1 // pred_check_branch
      %13 = sbr.rel (0) target = $region5
    $region4: #{tpu_custom_call.1} parent=1 // pred_region
      %s14 = sadd.s32 0, 0
      %16 = vsyncadd [#allocation5], 0
      %s17 = smul.addr %s14, 8
      %s18 = scalar_lea.hbm %s0, %s17
      %s20 = sshll.u32 %s18, 4
      %s21 = int_to_ptr.hbm [resolvable:$true] %s20
      %s22 = sshll.u32 [#allocation4], 4
      %s23 = int_to_ptr.vmem [resolvable:$true] %s22
      %25 = dma.hbm_to_vmem [thread:$0]  %s21, 128, %s23, [#allocation5]
    $region5: #{tpu_custom_call.1} parent=1 // pred_fallthru
      _
    // Predicated region
    $region6: #{tpu_custom_call.1} parent=1 // pred_check
      _
    $region7: #{tpu_custom_call.1} parent=1 // pred_check_branch
      %27 = sbr.rel (0) target = $region9
    $region8: #{tpu_custom_call.1} parent=1 // pred_region
      %s28 = sadd.s32 0, 0
      %30 = vsyncadd [#allocation8], 0
      %s31 = smul.addr %s28, 8
      %s32 = scalar_lea.hbm %s1, %s31
      %s34 = sshll.u32 %s32, 4
      %s35 = int_to_ptr.hbm [resolvable:$true] %s34
      %s36 = sshll.u32 [#allocation7], 4
      %s37 = int_to_ptr.vmem [resolvable:$true] %s36
      %39 = dma.hbm_to_vmem [thread:$0]  %s35, 128, %s37, [#allocation8]
    $region9: #{tpu_custom_call.1} parent=1 // pred_fallthru
      _
    // Predicated region
    $region10: #{tpu_custom_call.1} parent=1 // pred_check
      _
    $region11: #{tpu_custom_call.1} parent=1 // pred_check_branch
      %41 = sbr.rel (0) target = $region13
    $region12: #{tpu_custom_call.1} parent=1 // pred_region
      %s42 = sadd.s32 0, 0
      %p43 = scmp.lt.s32.totalorder %s42, 0
      %s44 = scalar_select %p43, %s42, 0
      %s45 = scalar_lea.vmem %s2, %s44
      %s46 = sadd.s32 0, 0
    $region13: #{tpu_custom_call.1} parent=1 // pred_fallthru
      _
    // Predicated region
    $region14: #{tpu_custom_call.1} parent=1 // pred_check
      _
    $region15: #{tpu_custom_call.1} parent=1 // pred_check_branch
      %48 = sbr.rel (0) target = $region17
    $region16: #{tpu_custom_call.1} parent=1 // pred_region
      %s49 = sadd.s32 0, 0
      %p50 = scmp.lt.s32.totalorder %s49, 0
      %s51 = scalar_select %p50, %s49, 0
      %s52 = scalar_lea.vmem %s3, %s51
      %s53 = sadd.s32 0, 0
    $region17: #{tpu_custom_call.1} parent=1 // pred_fallthru
      _
    // Predicated region
    $region18: #{tpu_custom_call.1} parent=1 // pred_check
      _
    $region19: #{tpu_custom_call.1} parent=1 // pred_check_branch
      %55 = sbr.rel (0) target = $region21
    $region20: #{tpu_custom_call.1} parent=1 // pred_region
      %57 = dma.done [#allocation5], 128
    $region21: #{tpu_custom_call.1} parent=1 // pred_fallthru
      _
    // Predicated region
    $region22: #{tpu_custom_call.1} parent=1 // pred_check
      _
    $region23: #{tpu_custom_call.1} parent=1 // pred_check_branch
      %59 = sbr.rel (0) target = $region25
    $region24: #{tpu_custom_call.1} parent=1 // pred_region
      %61 = dma.done [#allocation8], 128
    $region25: #{tpu_custom_call.1} parent=1 // pred_fallthru
      _
    %s62 = sadd.s32 0, 0
    %p63 = scmp.lt.s32.totalorder %s62, 0
    %s64 = scalar_select %p63, %s62, 0
    %s65 = scalar_lea.vmem %s2, %s64
    %s66 = sadd.s32 0, 0
    %p67 = scmp.lt.s32.totalorder %s66, 0
    %s68 = scalar_select %p67, %s66, 0
    %s69 = scalar_lea.vmem %s3, %s68
    %s70 = sadd.s32 0, 0
    %s71 = sadd.s32 0, 0
    %s72 = sadd.s32 0, 0
    %p73 = scmp.lt.s32.totalorder %s72, 0
    %s74 = scalar_select %p73, %s72, 0
    %s75 = scalar_lea.vmem %s2, %s74
    %s76 = sadd.s32 0, 0
    %s77 = sadd.s32 0, 0
    %p78 = scmp.lt.s32.totalorder %s77, 0
    %s79 = scalar_select %p78, %s77, 0
    %s80 = scalar_lea.vmem %s3, %s79
    %s81 = sadd.s32 0, 0
    %p82 = scmp.eq.s32.totalorder 0, 0
    // Predicated region
    $region26: #{tpu_custom_call.1} parent=1 // pred_check
      %p83 = pneg %p82
    $region27: #{tpu_custom_call.1} parent=1 // pred_check_branch
      %85 = sbr.rel (%p83) target = $region29
    $region28: #{tpu_custom_call.1} parent=1 // pred_region
      %86 = vst [vmem:[#allocation2] sm:$0x1] 0.0
      %vm87 = vcmask 57344
      %88 = vst.msk [vmem:[#allocation3] sm:$0x1] %vm87, 0.0
    $region29: #{tpu_custom_call.1} parent=1 // pred_fallthru
      _
    %v89 = vld [vmem:[#allocation7] sm:$0xff]
    %v90 = vld [vmem:[#allocation4] sm:$0xff]
    %v91 = vmul.f32 %v89, %v90
    %v92 = vld [vmem:[#allocation2] sm:$0x1]
    %v93 = vrot.slane %v91, 4
    %v94 = vadd.f32 %v91, %v93
    %v95 = vrot.slane %v94, 2
    %v96 = vadd.f32 %v94, %v95
    %v97 = vrot.slane %v96, 1
    %v98 = vadd.f32 %v96, %v97
    %v99 = vadd.f32 %v92, %v98
    %100 = vst [vmem:[#allocation2] sm:$0x1] %v99
    %v101 = vld [vmem:[%s75] sm:$0x1]
    %v102 = vld [vmem:[%s80] sm:$0x1]
    %v103 = vsub.f32 %v101, %v102
    %v104 = vld [vmem:[#allocation3] sm:$0x1]
    %v105 = vmul.f32 %v103, %v103
    %v106 = vadd.f32 %v104, %v105
    %vm107 = vcmask 57344
    %108 = vst.msk [vmem:[#allocation3] sm:$0x1] %vm107, %v106
    // Predicated region
    $region30: #{tpu_custom_call.1} parent=1 // pred_check
      %p109 = pneg %p82
    $region31: #{tpu_custom_call.1} parent=1 // pred_check_branch
      %111 = sbr.rel (%p109) target = $region33
    $region32: #{tpu_custom_call.1} parent=1 // pred_region
      %v112 = vld [vmem:[#allocation3] sm:$0x1]
      %v113 = vsel %vm107, %v112, 0.0
      %114 = vadd.xlane.f32.xlu0 %v113
      %v115 = vpop.xlane.xlu0 %114
      %v116 = vrot.slane %v115, 4
      %v117 = vadd.f32 %v115, %v116
      %v118 = vrot.slane %v117, 2
      %v119 = vadd.f32 %v117, %v118
      %v120 = vrot.slane %v119, 1
      %v121 = vadd.f32 %v119, %v120
      %s122 = vtos %v121
      %s123 = smul.f32 %s122, 0.125
      %v124 = vld [vmem:[#allocation2] sm:$0x1]
      %vm125 = vcmask 1040384
      %v126 = vsel %vm125, %v124, 0.0
      %127 = vadd.xlane.f32.xlu0 %v126
      %v128 = vpop.xlane.xlu0 %127
      %v129 = vrot.slane %v128, 4
      %v130 = vadd.f32 %v128, %v129
      %v131 = vrot.slane %v130, 2
      %v132 = vadd.f32 %v130, %v131
      %v133 = vrot.slane %v132, 1
      %v134 = vadd.f32 %v132, %v133
      %s135 = vtos %v134
      %s136 = ssub.f32 0.0, %s135
      %s137 = smul.f32 %s136, 0.125
      %s138 = sadd.f32 %s123, %s137
      %v139 = vstv %s138
      %140 = vst [vmem:[#allocation9] sm:$0x1] %v139
    $region33: #{tpu_custom_call.1} parent=1 // pred_fallthru
      _
    // Predicated region
    $region34: #{tpu_custom_call.1} parent=1 // pred_check
      _
    $region35: #{tpu_custom_call.1} parent=1 // pred_check_branch
      %142 = sbr.rel (0) target = $region37
    $region36: #{tpu_custom_call.1} parent=1 // pred_region
      %144 = vsyncadd [#allocation6], 0
      %s146 = sshll.u32 [#allocation9], 4
      %s147 = int_to_ptr.vmem [resolvable:$true] %s146
      %s148 = sshll.u32 %s4, 4
      %s149 = int_to_ptr.hbm [resolvable:$true] %s148
      %151 = dma.vmem_to_hbm [thread:$0]  %s147, 16, %s149, [#allocation6]
    $region37: #{tpu_custom_call.1} parent=1 // pred_fallthru
      _
    // Predicated region
    $region38: #{tpu_custom_call.1} parent=1 // pred_check
      _
    $region39: #{tpu_custom_call.1} parent=1 // pred_check_branch
      %153 = sbr.rel (0) target = $region41
    $region40: #{tpu_custom_call.1} parent=1 // pred_region
      %155 = dma.done [#allocation6], 16
    $region41: #{tpu_custom_call.1} parent=1 // pred_fallthru
      _
    %156 = vsyncpa [#allocation5], 1
    %157 = vsyncpa [#allocation8], 1
    %158 = vsyncpa [#allocation6], 1

</llo_original>
